<compile_context>
chip_gen: v7x
topology: tpu7x:2x2x1
jax: 0.10.0
libtpu: 0.0.40
codegen_flags: <defaults>
</compile_context>

<pallas_src>
import functools

import jax
import jax.numpy as jnp
from jax.experimental import pallas as pl
from jax.experimental.pallas import tpu as pltpu


def _round_up(x: int, m: int) -> int:
    return ((x + m - 1) // m) * m


def _largest_tile(total: int, target: int, granule: int = 128) -> int:
    """Largest multiple of `granule` that divides `total` and is <= max(target, granule).

    `total` is assumed to be a multiple of `granule` (params are pre-padded).
    """
    target = max(target, granule)
    if total <= target:
        return total
    q = total // granule
    best = granule
    for d in range(1, q + 1):
        if q % d == 0 and d * granule <= target:
            best = d * granule
    return best


def _vmem_need(tm: int, tk: int, tn: int, out_bytes: int) -> int:
    return (2 * tm * tk * 2          # bf16 x tiles (double-buffered)
            + 2 * tk * tn * 2        # bf16 W tiles (double-buffered)
            + 2 * tn * 4             # f32 bias tiles
            + 2 * tm * tn * out_bytes  # output tiles (double-buffered)
            + tm * tn * 4)           # f32 accumulator scratch


@functools.lru_cache(maxsize=1)
def _vmem_budget_bytes() -> int:
    """Generation-aware usable VMEM: ~96 MiB on v5e/v6e (128 MiB phys),
    ~48 MiB on v7x (64 MiB phys per TC).  Falls back conservatively."""
    try:
        cap = int(pltpu.get_tpu_info().vmem_capacity_bytes)
    except Exception:  # not on TPU / API unavailable
        cap = 64 * 1024 * 1024
    return cap * 3 // 4


def _fit_tiles(k_pad: int, n_pad: int, tm: int, tk_target: int, tn_target: int,
               out_bytes: int, budget: int):
    tk = _largest_tile(k_pad, tk_target)
    tn = _largest_tile(n_pad, tn_target)
    while _vmem_need(tm, tk, tn, out_bytes) > budget:
        if tk > 128 and tk >= tn:
            tk = _largest_tile(k_pad, tk // 2)
        elif tn > 128:
            tn = _largest_tile(n_pad, tn // 2)
        else:
            break
    return tk, tn


def _repeater_linear_kernel(ridx_ref, x_ref, w_ref, b_ref, o_ref, acc_ref):
    # x_ref: (TM, TK) bf16   w_ref: (TK, TN) bf16   b_ref: (1, TN) f32
    # o_ref: (TM, TN)        acc_ref: (TM, TN) f32 scratch (resident across K)
    del ridx_ref  # module selection happens entirely in the index_maps
    k = pl.program_id(2)

    @pl.when(k == 0)
    def _init():
        # Fold the bias into the accumulator init (no epilogue VPU add).
        acc_ref[...] = jnp.broadcast_to(
            b_ref[...].astype(jnp.float32), acc_ref.shape)

    acc_ref[...] += jnp.dot(
        x_ref[...], w_ref[...], preferred_element_type=jnp.float32)

    @pl.when(k == pl.num_programs(2) - 1)
    def _finalize():
        o_ref[...] = acc_ref[...].astype(o_ref.dtype)


@functools.partial(
    jax.jit, static_argnames=("out_features", "tm", "tn", "tk", "out_dtype"))
def module_repeater_forward(x, stacked_w, stacked_b, repeat_idx, *,
                            out_features, tm=256, tn=512, tk=2048,
                            out_dtype=None):
    """ModuleRepeater.forward(x, repeat_key=repeat_idx) with Linear inner modules.

    x:          (batch, in_features)        any float dtype (cast to bf16 inside)
    stacked_w:  (R, k_pad, n_pad) bf16      pre-padded/pre-cast (make_repeater_params)
    stacked_b:  (R, 1, n_pad)    f32        pre-padded
    repeat_idx: (1,) int32                  which inner module to dispatch to
    out_features: logical N (output is sliced back to it)
    """
    batch, in_f = x.shape
    r, k_pad, n_pad = stacked_w.shape
    if in_f > k_pad or out_features > n_pad:
        raise ValueError("stacked params are smaller than the logical layer")
    if out_dtype is None:
        out_dtype = x.dtype
    out_bytes = jnp.dtype(out_dtype).itemsize

    # ---- tile sizes (16-sublane M for bf16 packing; K/N divisors of padded dims) ----
    tm_eff = min(_round_up(tm, 16), _round_up(batch, 16))
    m_pad = _round_up(batch, tm_eff)

    budget = _vmem_budget_bytes()
    tk_eff, tn_eff = _fit_tiles(k_pad, n_pad, tm_eff, tk, tn, out_bytes, budget)

    gm = m_pad // tm_eff
    gn = n_pad // tn_eff
    gk = k_pad // tk_eff

    # v7x megacore: with gm == 1 the N axis is the only one that can be sharded
    # across the two TensorCores -- keep at least two N tiles (harmless on 1-TC chips).
    if gm == 1 and gn == 1 and n_pad >= 256:
        tn_eff = _largest_tile(n_pad, n_pad // 2)
        gn = n_pad // tn_eff

    # ---- pad only x (small); weights/biases were padded once at creation ----
    x_p = x.astype(jnp.bfloat16)
    if m_pad != batch or k_pad != in_f:
        x_p = jnp.pad(x_p, ((0, m_pad - batch), (0, k_pad - in_f)))

    # ---- index maps: prefetched repeat index selects the parameter slab ----
    # NOTE: out-of-range repeat_idx is clamped (PyTorch would raise).
    def _sel(ridx_ref):
        return jnp.clip(ridx_ref[0], 0, r - 1)

    x_map = lambda i, j, k, ridx: (i, k)
    w_map = lambda i, j, k, ridx: (_sel(ridx), k, j)
    b_map = lambda i, j, k, ridx: (_sel(ridx), 0, j)
    o_map = lambda i, j, k, ridx: (i, j)

    grid_spec = pltpu.PrefetchScalarGridSpec(
        num_scalar_prefetch=1,
        grid=(gm, gn, gk),
        in_specs=[
            pl.BlockSpec((tm_eff, tk_eff), x_map),
            pl.BlockSpec((pl.Squeezed(), tk_eff, tn_eff), w_map),
            pl.BlockSpec((pl.Squeezed(), 1, tn_eff), b_map),
        ],
        out_specs=pl.BlockSpec((tm_eff, tn_eff), o_map),
        scratch_shapes=[pltpu.VMEM((tm_eff, tn_eff), jnp.float32)],
    )

    vmem_needed = _vmem_need(tm_eff, tk_eff, tn_eff, out_bytes)
    vmem_limit = int(min(budget, max(32 * 1024 * 1024, 2 * vmem_needed)))

    cost = pl.CostEstimate(
        flops=2 * m_pad * k_pad * n_pad,
        transcendentals=0,
        bytes_accessed=(gn * m_pad * k_pad * 2            # x re-read per N tile
                        + gm * (k_pad * n_pad * 2         # selected W slab per M tile
                                + n_pad * 4)              # selected bias
                        + m_pad * n_pad * out_bytes),     # output writeback
    )

    out_p = pl.pallas_call(
        _repeater_linear_kernel,
        out_shape=jax.ShapeDtypeStruct((m_pad, n_pad), out_dtype),
        grid_spec=grid_spec,
        compiler_params=pltpu.CompilerParams(
            dimension_semantics=("parallel", "parallel", "arbitrary"),
            vmem_limit_bytes=vmem_limit,
        ),
        cost_estimate=cost,
    )(repeat_idx, x_p, stacked_w, stacked_b)

    return out_p[:batch, :out_features]


def make_repeater_params(key, repeats, in_features, out_features):
    """Per-repeat nn.Linear params (default PyTorch-style init), pre-cast to
    bf16 and pre-padded (with zeros) to 128-multiple K/N once, so the forward
    pass never copies or pads the stacked tensor again."""
    k_pad = _round_up(in_features, 128)
    n_pad = _round_up(out_features, 128)
    bound = 1.0 / (in_features ** 0.5)
    ws, bs = [], []
    for i in range(repeats):
        kw, kb = jax.random.split(jax.random.fold_in(key, i))
        w = jax.random.uniform(kw, (in_features, out_features),
                               minval=-bound, maxval=bound, dtype=jnp.float32)
        b = jax.random.uniform(kb, (1, out_features),
                               minval=-bound, maxval=bound, dtype=jnp.float32)
        ws.append(jnp.pad(w.astype(jnp.bfloat16),
                          ((0, k_pad - in_features), (0, n_pad - out_features))))
        bs.append(jnp.pad(b, ((0, 0), (0, n_pad - out_features))))
    return jnp.stack(ws, axis=0), jnp.stack(bs, axis=0)


if __name__ == "__main__":
    key = jax.random.PRNGKey(0)

    REPEATS = 4
    BATCH = 16

    # Aligned and ragged (non-128-multiple) layer shapes; small tiles here
    # purely to exercise the multi-step (N, K) grid on a small demo problem.
    # Production defaults are tm=256, tn=512, tk=2048.
    for in_f, out_f in ((256, 384), (200, 300)):
        kx, kp = jax.random.split(jax.random.fold_in(key, in_f))
        x = jax.random.normal(kx, (BATCH, in_f), dtype=jnp.float32)
        stacked_w, stacked_b = make_repeater_params(kp, REPEATS, in_f, out_f)

        for repeat_key in (2, 0):
            # PyTorch semantics: assert repeat_key in self.repeats (host-side here).
            assert 0 <= repeat_key < REPEATS
            ridx = jnp.array([repeat_key], dtype=jnp.int32)
            y = module_repeater_forward(x, stacked_w, stacked_b, ridx,
                                        out_features=out_f,
                                        tm=128, tn=128, tk=128)
            y = jax.block_until_ready(y)

            # pure-JAX reference of the same forward (selected Linear, bf16
            # operands, f32 accumulation)
            x_q = x.astype(jnp.bfloat16).astype(jnp.float32)
            w_q = stacked_w[repeat_key, :in_f, :out_f].astype(jnp.float32)
            b_q = stacked_b[repeat_key, :, :out_f]
            y_ref = x_q @ w_q + b_q

            assert y.shape == (BATCH, out_f)
            assert jnp.allclose(y, y_ref, atol=2e-2, rtol=2e-2), float(
                jnp.max(jnp.abs(y - y_ref)))

    print("KERNEL_OK")
</pallas_src>

<mosaic_0001>
module attributes {stable_mosaic.version = 11 : i64} {
  func.func @_repeater_linear_kernel(%arg0: i32, %arg1: i32, %arg2: i32, %arg3: memref<1xi32, #tpu.memory_space<smem>>, %arg4: memref<16x128xbf16, #tpu.memory_space<vmem>>, %arg5: memref<1x128x128xbf16, #tpu.memory_space<vmem>>, %arg6: memref<1x1x128xf32, #tpu.memory_space<vmem>>, %arg7: memref<16x128xf32, #tpu.memory_space<vmem>>, %arg8: memref<16x128xf32, #tpu.memory_space<vmem>>) attributes {dimension_semantics = [#tpu.dimension_semantics<parallel>, #tpu.dimension_semantics<parallel>, #tpu.dimension_semantics<arbitrary>], iteration_bounds = array<i64: 1, 3, 2>, scalar_prefetch = 1 : i64, scratch_operands = 1 : i64, tpu.core_type = #tpu.core_type<tc>, window_params = [{transform_indices = @transform_0, window_bounds = array<i64: 16, 128>}, {transform_indices = @transform_1, window_bounds = array<i64: 1, 128, 128>}, {transform_indices = @transform_2, window_bounds = array<i64: 1, 1, 128>}, {transform_indices = @transform_3, window_bounds = array<i64: 16, 128>}]} {
    %c0_i32 = arith.constant 0 : i32
    %0 = arith.cmpi eq, %arg2, %c0_i32 : i32
    %1 = arith.extui %0 : i1 to i32
    %c0_i32_0 = arith.constant 0 : i32
    %2 = arith.cmpi ne, %1, %c0_i32_0 : i32
    scf.if %2 {
      %c0_10 = arith.constant 0 : index
      %c0_11 = arith.constant 0 : index
      %c0_12 = arith.constant 0 : index
      %13 = vector.load %arg6[%c0_10, %c0_11, %c0_12] : memref<1x1x128xf32, #tpu.memory_space<vmem>>, vector<1x1x128xf32>
      %14 = vector.shape_cast %13 : vector<1x1x128xf32> to vector<1x128xf32>
      %15 = vector.shape_cast %14 : vector<1x128xf32> to vector<1x128xf32>
      %16 = vector.broadcast %15 : vector<1x128xf32> to vector<16x128xf32>
      %c0_13 = arith.constant 0 : index
      %c0_14 = arith.constant 0 : index
      %17 = vector.load %arg8[%c0_13, %c0_14] : memref<16x128xf32, #tpu.memory_space<vmem>>, vector<16x128xf32>
      tpu.vector_store %arg8[%c0_13, %c0_14], %16 {strides = array<i32>} : memref<16x128xf32, #tpu.memory_space<vmem>>, vector<16x128xf32>,
    } else {
    }
    %c0 = arith.constant 0 : index
    %c0_1 = arith.constant 0 : index
    %3 = vector.load %arg8[%c0, %c0_1] : memref<16x128xf32, #tpu.memory_space<vmem>>, vector<16x128xf32>
    %c0_2 = arith.constant 0 : index
    %c0_3 = arith.constant 0 : index
    %4 = vector.load %arg4[%c0_2, %c0_3] : memref<16x128xbf16, #tpu.memory_space<vmem>>, vector<16x128xbf16>
    %c0_4 = arith.constant 0 : index
    %c0_5 = arith.constant 0 : index
    %c0_6 = arith.constant 0 : index
    %5 = vector.load %arg5[%c0_4, %c0_5, %c0_6] : memref<1x128x128xbf16, #tpu.memory_space<vmem>>, vector<1x128x128xbf16>
    %6 = vector.shape_cast %5 : vector<1x128x128xbf16> to vector<128x128xbf16>
    %cst = arith.constant dense<0.000000e+00> : vector<16x128xf32>
    %7 = tpu.matmul %4, %6, %cst {dimension_numbers = #tpu.dot_dimension_numbers<[1], [0], [0], [1], [0, 0, 1, 1], [], []>} : vector<16x128xbf16>, vector<128x128xbf16>, vector<16x128xf32> -> vector<16x128xf32>
    %8 = arith.addf %3, %7 : vector<16x128xf32>
    %c0_7 = arith.constant 0 : index
    %c0_8 = arith.constant 0 : index
    %9 = vector.load %arg8[%c0_7, %c0_8] : memref<16x128xf32, #tpu.memory_space<vmem>>, vector<16x128xf32>
    tpu.vector_store %arg8[%c0_7, %c0_8], %8 {strides = array<i32>} : memref<16x128xf32, #tpu.memory_space<vmem>>, vector<16x128xf32>,
    %c1_i32 = arith.constant 1 : i32
    %10 = arith.cmpi eq, %arg2, %c1_i32 : i32
    %11 = arith.extui %10 : i1 to i32
    %c0_i32_9 = arith.constant 0 : i32
    %12 = arith.cmpi ne, %11, %c0_i32_9 : i32
    scf.if %12 {
      %c0_10 = arith.constant 0 : index
      %c0_11 = arith.constant 0 : index
      %13 = vector.load %arg8[%c0_10, %c0_11] : memref<16x128xf32, #tpu.memory_space<vmem>>, vector<16x128xf32>
      %c0_12 = arith.constant 0 : index
      %c0_13 = arith.constant 0 : index
      %14 = vector.load %arg7[%c0_12, %c0_13] : memref<16x128xf32, #tpu.memory_space<vmem>>, vector<16x128xf32>
      tpu.vector_store %arg7[%c0_12, %c0_13], %13 {strides = array<i32>} : memref<16x128xf32, #tpu.memory_space<vmem>>, vector<16x128xf32>,
    } else {
    }
    return
  }
  func.func @transform_0(%arg0: i32, %arg1: i32, %arg2: i32, %arg3: memref<1xi32, #tpu.memory_space<smem>>) -> (i32, i32) {
    %c0_i32 = arith.constant 0 : i32
    return %arg0, %arg2 : i32, i32
  }
  func.func @transform_1(%arg0: i32, %arg1: i32, %arg2: i32, %arg3: memref<1xi32, #tpu.memory_space<smem>>) -> (i32, i32, i32) {
    %c0 = arith.constant 0 : index
    %0 = memref.load %arg3[%c0] : memref<1xi32, #tpu.memory_space<smem>>
    %c0_i32 = arith.constant 0 : i32
    %c3_i32 = arith.constant 3 : i32
    %1 = arith.maxsi %c0_i32, %0 : i32
    %2 = arith.minsi %c3_i32, %1 : i32
    %c0_i32_0 = arith.constant 0 : i32
    return %2, %arg2, %arg1 : i32, i32, i32
  }
  func.func @transform_2(%arg0: i32, %arg1: i32, %arg2: i32, %arg3: memref<1xi32, #tpu.memory_space<smem>>) -> (i32, i32, i32) {
    %c0 = arith.constant 0 : index
    %0 = memref.load %arg3[%c0] : memref<1xi32, #tpu.memory_space<smem>>
    %c0_i32 = arith.constant 0 : i32
    %c3_i32 = arith.constant 3 : i32
    %1 = arith.maxsi %c0_i32, %0 : i32
    %2 = arith.minsi %c3_i32, %1 : i32
    %c0_i32_0 = arith.constant 0 : i32
    %c0_i32_1 = arith.constant 0 : i32
    return %2, %c0_i32_0, %arg1 : i32, i32, i32
  }
  func.func @transform_3(%arg0: i32, %arg1: i32, %arg2: i32, %arg3: memref<1xi32, #tpu.memory_space<smem>>) -> (i32, i32) {
    %c0_i32 = arith.constant 0 : i32
    return %arg0, %arg1 : i32, i32
  }
}

</mosaic_0001>

<llo_original>
// kernel: module_repeater_forward.1
$region0: #{module_repeater_forward.1}
  #allocation0 [shape = 'u32[]', space=smem, size = 0x4, offset = 0x4, fixed_abs, tag = 'smem constant byte address 0x4 - core index']
  #allocation1 [shape = 'u32[144,128]{1,0:T(1,128)}', space=vmem, size = 0x12000, scoped, tag = 'internal scratch']
  #allocation2 [shape = 'f32[16,128]{1,0:T(8,128)}', space=vmem, size = 0x2000, scoped, tag = 'scratch operand']
  #allocation3 [shape = 's32[1]{0}', space=sflag, size = 0x4, scoped, tag = 'scoped memory for module_repeater_forward.1']
  #allocation4 [shape = 's32[1]{0:T(128)S(6)}', space=smem, size = 0x200, scoped, tag = 'prefetched SMEM operand 0']
  %s0 = inlined_call_operand.<no memory space> [shape: s32[1], index: 0, kind: input, shape index: {}]
  %s1 = inlined_call_operand.vmem [shape: bf16[16,256], index: 1, kind: input, shape index: {}]
  %s2 = inlined_call_operand.hbm [shape: bf16[4,256,384], index: 2, kind: input, shape index: {}]
  %s3 = inlined_call_operand.vmem [shape: f32[4,1,384], index: 3, kind: input, shape index: {}]
  %s4 = inlined_call_operand.hbm [shape: f32[16,384], index: 4, kind: output, shape index: {}]
  %s5 = sld [smem:[#allocation0]]
  $region98: #{module_repeater_forward.1} parent=0
    _
  %s7 = ssub.s32 1, %s5
  %s8 = scalar_select 0, %s7, %s5
  %9 = sst [smem:[#allocation4]] %s0
  $region1: #{module_repeater_forward.1} parent=0
    #allocation5 [shape = 'u8[8192]{0}', space=vmem, size = 0x2000, scoped, tag = 'input window, operand 1']
    #allocation6 [shape = 'u8[65536]{0}', space=vmem, size = 0x10000, scoped, tag = 'input window, operand 2']
    #allocation7 [shape = 's32[2]{0}', space=sflag, size = 0x8, scoped, tag = 'scoped memory for module_repeater_forward.1']
    #allocation8 [shape = 's32[2]{0}', space=sflag, size = 0x8, scoped, tag = 'scoped memory for module_repeater_forward.1']
    #allocation9 [shape = 'u8[16384]{0}', space=vmem, size = 0x4000, scoped, tag = 'output window, operand 0']
    %10 = vsyncpa [#allocation7], 0
    %s11 = scalar_lea.sflag [#allocation7], 1
    %12 = vsyncpa %s11, 0
    %13 = vsyncpa [#allocation8], 0
    %s14 = scalar_lea.sflag [#allocation8], 1
    %15 = vsyncpa %s14, 0
    loop: start=0, step=1, limit=8
    $region2: #{module_repeater_forward.1} parent=1 // loop_pre_header
      _
    $region3: #{module_repeater_forward.1} parent=1 // loop_header
      %s17 = sphi 0, %s21
      %p18 = scmp.ge.s32.totalorder %s17, 8
      %s24 = sphi 0, %s43
      %s25 = sphi 0, %s39
      %s26 = sphi 0, %s35
      %s27 = sphi 0, %s24
      %s28 = sphi 0, %s25
      %s29 = sphi 0, %s26
      %s30 = sphi 0, %s27
      %s31 = sphi 0, %s28
      %s32 = sphi 0, %s29
      %s48 = sphi 0, %s50
      %s51 = sphi 0, %s48
      %s52 = sphi 0, %s51
      %s68 = sphi 0, %s52
      %s88 = sphi 0, %s90
      %s91 = sphi 0, %s88
      %s92 = sphi 0, %s91
      %s108 = sphi 0, %s92
      %s126 = sphi 0, %s128
      %s129 = sphi 0, %s126
      %s130 = sphi 0, %s129
      %s146 = sphi 0, %s130
      %s154 = sphi 0, %s156
      %s157 = sphi 0, %s154
      %s158 = sphi 0, %s157
      %s174 = sphi 0, %s158
    $region4: #{module_repeater_forward.1} parent=1 // loop_header_branch
      %20 = sbr.rel (%p18) target = $region8
    $region5: #{module_repeater_forward.1} parent=1 // loop_body
      %s22 = ssub.s32 %s17, 1
      %s23 = ssub.s32 %s17, 2
      %s33 = sadd.s32 1, %s26
      %p34 = scmp.ge.s32.totalorder %s33, 2
      %s35 = scalar_select %p34, 0, %s33
      %s36 = sadd.s32 1, %s25
      %s37 = scalar_select %p34, %s36, %s25
      %p38 = scmp.ge.s32.totalorder %s37, 3
      %s39 = scalar_select %p38, 0, %s37
      %s40 = sadd.s32 1, %s24
      %s41 = scalar_select %p38, %s40, %s24
      %p42 = scmp.ge.s32.totalorder %s41, 1
      %s43 = scalar_select %p42, 0, %s41
      %s44 = ssub.s32 %s24, %s43
      %s45 = ssub.s32 %s26, %s35
      %s46 = sor.u32 %s44, %s45
      %p47 = scmp.eq.s32.totalorder %s46, 0
      %s49 = sadd.s32 %s48, 1
      %s50 = scalar_select %p47, %s48, %s49
      %p53 = pneg %p47
      %p54 = scmp.eq.s32.totalorder %s17, 5
      %p55 = por %p53, %p54
      %p56 = scmp.ne.s32.totalorder %s48, %s51
      %p57 = scmp.eq.s32.totalorder %s17, 0
      %p58 = por %p56, %p57
      %p59 = scmp.ne.s32.totalorder %s48, %s51
      %p60 = scmp.eq.s32.totalorder %s22, 5
      %p61 = por %p59, %p60
      %p62 = scmp.ne.s32.totalorder %s51, %s52
      %p63 = scmp.eq.s32.totalorder %s22, 0
      %p64 = por %p62, %p63
      %p65 = scmp.ne.s32.totalorder %s51, %s52
      %p66 = scmp.eq.s32.totalorder %s23, 5
      %p67 = por %p65, %p66
      %p69 = scmp.ne.s32.totalorder %s52, %s68
      %p70 = scmp.eq.s32.totalorder %s23, 0
      %p71 = por %p69, %p70
      %s72 = sld [smem:[#allocation4]]
      %p73 = scmp.gt.s32.totalorder %s72, 0
      %s74 = scalar_select %p73, %s72, 0
      %p75 = scmp.lt.s32.totalorder %s74, 3
      %s76 = scalar_select %p75, %s74, 3
      %s77 = sld [smem:[#allocation4]]
      %p78 = scmp.gt.s32.totalorder %s77, 0
      %s79 = scalar_select %p78, %s77, 0
      %p80 = scmp.lt.s32.totalorder %s79, 3
      %s81 = scalar_select %p80, %s79, 3
      %s82 = ssub.s32 %s76, %s81
      %s83 = ssub.s32 %s26, %s35
      %s84 = sor.u32 %s82, %s83
      %s85 = ssub.s32 %s25, %s39
      %s86 = sor.u32 %s84, %s85
      %p87 = scmp.eq.s32.totalorder %s86, 0
      %s89 = sadd.s32 %s88, 1
      %s90 = scalar_select %p87, %s88, %s89
      %p93 = pneg %p87
      %p94 = scmp.eq.s32.totalorder %s17, 5
      %p95 = por %p93, %p94
      %p96 = scmp.ne.s32.totalorder %s88, %s91
      %p97 = scmp.eq.s32.totalorder %s17, 0
      %p98 = por %p96, %p97
      %p99 = scmp.ne.s32.totalorder %s88, %s91
      %p100 = scmp.eq.s32.totalorder %s22, 5
      %p101 = por %p99, %p100
      %p102 = scmp.ne.s32.totalorder %s91, %s92
      %p103 = scmp.eq.s32.totalorder %s22, 0
      %p104 = por %p102, %p103
      %p105 = scmp.ne.s32.totalorder %s91, %s92
      %p106 = scmp.eq.s32.totalorder %s23, 5
      %p107 = por %p105, %p106
      %p109 = scmp.ne.s32.totalorder %s92, %s108
      %p110 = scmp.eq.s32.totalorder %s23, 0
      %p111 = por %p109, %p110
      %s112 = sld [smem:[#allocation4]]
      %p113 = scmp.gt.s32.totalorder %s112, 0
      %s114 = scalar_select %p113, %s112, 0
      %p115 = scmp.lt.s32.totalorder %s114, 3
      %s116 = scalar_select %p115, %s114, 3
      %s117 = sld [smem:[#allocation4]]
      %p118 = scmp.gt.s32.totalorder %s117, 0
      %s119 = scalar_select %p118, %s117, 0
      %p120 = scmp.lt.s32.totalorder %s119, 3
      %s121 = scalar_select %p120, %s119, 3
      %s122 = ssub.s32 %s116, %s121
      %s123 = ssub.s32 %s25, %s39
      %s124 = sor.u32 %s122, %s123
      %p125 = scmp.eq.s32.totalorder %s124, 0
      %s127 = sadd.s32 %s126, 1
      %s128 = scalar_select %p125, %s126, %s127
      %p131 = pneg %p125
      %p132 = scmp.eq.s32.totalorder %s17, 5
      %p133 = por %p131, %p132
      %p134 = scmp.ne.s32.totalorder %s126, %s129
      %p135 = scmp.eq.s32.totalorder %s17, 0
      %p136 = por %p134, %p135
      %p137 = scmp.ne.s32.totalorder %s126, %s129
      %p138 = scmp.eq.s32.totalorder %s22, 5
      %p139 = por %p137, %p138
      %p140 = scmp.ne.s32.totalorder %s129, %s130
      %p141 = scmp.eq.s32.totalorder %s22, 0
      %p142 = por %p140, %p141
      %p143 = scmp.ne.s32.totalorder %s129, %s130
      %p144 = scmp.eq.s32.totalorder %s23, 5
      %p145 = por %p143, %p144
      %p147 = scmp.ne.s32.totalorder %s130, %s146
      %p148 = scmp.eq.s32.totalorder %s23, 0
      %p149 = por %p147, %p148
      %s150 = ssub.s32 %s24, %s43
      %s151 = ssub.s32 %s25, %s39
      %s152 = sor.u32 %s150, %s151
      %p153 = scmp.eq.s32.totalorder %s152, 0
      %s155 = sadd.s32 %s154, 1
      %s156 = scalar_select %p153, %s154, %s155
      %p159 = pneg %p153
      %p160 = scmp.eq.s32.totalorder %s17, 5
      %p161 = por %p159, %p160
      %p162 = scmp.ne.s32.totalorder %s154, %s157
      %p163 = scmp.eq.s32.totalorder %s17, 0
      %p164 = por %p162, %p163
      %p165 = scmp.ne.s32.totalorder %s154, %s157
      %p166 = scmp.eq.s32.totalorder %s22, 5
      %p167 = por %p165, %p166
      %p168 = scmp.ne.s32.totalorder %s157, %s158
      %p169 = scmp.eq.s32.totalorder %s22, 0
      %p170 = por %p168, %p169
      %p171 = scmp.ne.s32.totalorder %s157, %s158
      %p172 = scmp.eq.s32.totalorder %s23, 5
      %p173 = por %p171, %p172
      %p175 = scmp.ne.s32.totalorder %s158, %s174
      %p176 = scmp.eq.s32.totalorder %s23, 0
      %p177 = por %p175, %p176
      %p178 = scmp.le.s32.totalorder 1, %s17
      %p179 = scmp.lt.s32.totalorder %s17, 7
      %p180 = pnand %p178, %p179
      %p181 = pneg %p180
      // Predicated region
      $region9: #{module_repeater_forward.1} parent=5 // pred_check
        _
      $region10: #{module_repeater_forward.1} parent=5 // pred_check_branch
        %183 = sbr.rel (%p180) target = $region12
      $region11: #{module_repeater_forward.1} parent=5 // pred_region
        %s184 = ssub.s32 %s17, 1
      $region12: #{module_repeater_forward.1} parent=5 // pred_fallthru
        _
      %p185 = scmp.lt.s32.totalorder %s17, 6
      // Predicated region
      $region13: #{module_repeater_forward.1} parent=5 // pred_check
        %p186 = pneg %p185
      $region14: #{module_repeater_forward.1} parent=5 // pred_check_branch
        %188 = sbr.rel (%p186) target = $region16
      $region15: #{module_repeater_forward.1} parent=5 // pred_region
        // Predicated region
        $region17: #{module_repeater_forward.1} parent=15 // pred_check
          %p189 = pneg %p58
        $region18: #{module_repeater_forward.1} parent=15 // pred_check_branch
          %191 = sbr.rel (%p189) target = $region20
        $region19: #{module_repeater_forward.1} parent=15 // pred_region
          %s192 = sand.u32 %s48, 1
          %s193 = sand.u32 %s48, 1
          %s194 = smul.addr %s193, 8
          %s195 = scalar_lea.vmem [#allocation5], %s194
          %s196 = smul.u32 2, %s24
          %s197 = smul.addr %s196, 2
          %s198 = sadd.s32 %s26, %s197
          %s199 = smul.addr %s198, 4
          %s200 = scalar_lea.vmem %s1, %s199
          // Predicated region
          $region21: #{module_repeater_forward.1} parent=19 // pred_check
            _
          $region22: #{module_repeater_forward.1} parent=19 // pred_check_branch
            %202 = sbr.rel (0) target = $region24
          $region23: #{module_repeater_forward.1} parent=19 // pred_region
            // Predicated region
            $region25: #{module_repeater_forward.1} parent=23 // pred_check
              _
            $region26: #{module_repeater_forward.1} parent=23 // pred_check_branch
              %204 = sbr.rel target = $region28
            $region27: #{module_repeater_forward.1} parent=23 // pred_region
              // Predicated region
              $region40: #{module_repeater_forward.1} parent=27 // pred_check
                _
              $region41: #{module_repeater_forward.1} parent=27 // pred_check_branch
                %221 = sbr.rel (0) target = $region43
              $region42: #{module_repeater_forward.1} parent=27 // pred_region
                loop: start=0, step=1, limit=1
                $region44: #{module_repeater_forward.1} parent=42 // loop_pre_header
                  _
                $region45: #{module_repeater_forward.1} parent=42 // loop_header
                  %s223 = sphi 0, %s227
                  %p224 = scmp.ge.s32.totalorder %s223, 1
                  %s228 = sphi %s200, %s200
                  %s229 = sphi %s195, %s195
                $region46: #{module_repeater_forward.1} parent=42 // loop_header_branch
                  %226 = sbr.rel (%p224) target = $region50
                $region47: #{module_repeater_forward.1} parent=42 // loop_body
                  _
                $region48: #{module_repeater_forward.1} parent=42 // loop_footer
                  %s227 = sadd.s32 1, %s223
                $region49: #{module_repeater_forward.1} parent=42 // loop_footer_branch
                  %222 = sbr.rel target = $region45
                $region50: #{module_repeater_forward.1} parent=42 // loop_exit
                  _
                loop: start=0, step=1, limit=1
                $region51: #{module_repeater_forward.1} parent=42 // loop_pre_header
                  _
                $region52: #{module_repeater_forward.1} parent=42 // loop_header
                  %s232 = sphi 0, %s236
                  %p233 = scmp.ge.s32.totalorder %s232, 1
                  %s237 = sphi %s200, %s200
                  %s238 = sphi %s195, %s195
                $region53: #{module_repeater_forward.1} parent=42 // loop_header_branch
                  %235 = sbr.rel (%p233) target = $region57
                $region54: #{module_repeater_forward.1} parent=42 // loop_body
                  %v239 = vld [vmem:[%s237] sm:$0xf]
                  %240 = vst [vmem:[%s238] sm:$0xf] %v239
                  %v241 = vld [vmem:[%s237 + $0x8] sm:$0xf]
                  %242 = vst [vmem:[%s238 + $0x4] sm:$0xf] %v241
                $region55: #{module_repeater_forward.1} parent=42 // loop_footer
                  %s236 = sadd.s32 1, %s232
                $region56: #{module_repeater_forward.1} parent=42 // loop_footer_branch
                  %231 = sbr.rel target = $region52
                $region57: #{module_repeater_forward.1} parent=42 // loop_exit
                  _
              $region43: #{module_repeater_forward.1} parent=27 // pred_fallthru
                _
            $region28: #{module_repeater_forward.1} parent=23 // pred_fallthru
              _
            // Predicated region
            $region29: #{module_repeater_forward.1} parent=23 // pred_check
              _
            $region30: #{module_repeater_forward.1} parent=23 // pred_check_branch
              %206 = sbr.rel (0) target = $region32
            $region31: #{module_repeater_forward.1} parent=23 // pred_region
              loop: start=0, step=1, limit=1
              $region33: #{module_repeater_forward.1} parent=31 // loop_pre_header
                _
              $region34: #{module_repeater_forward.1} parent=31 // loop_header
                %s209 = sphi 0, %s213
                %p210 = scmp.ge.s32.totalorder %s209, 1
                %s214 = sphi %s200, %s200
                %s215 = sphi %s195, %s195
              $region35: #{module_repeater_forward.1} parent=31 // loop_header_branch
                %212 = sbr.rel (%p210) target = $region39
              $region36: #{module_repeater_forward.1} parent=31 // loop_body
                %v216 = vld [vmem:[%s214] sm:$0xf]
                %217 = vst [vmem:[%s215] sm:$0xf] %v216
                %v218 = vld [vmem:[%s214 + $0x8] sm:$0xf]
                %219 = vst [vmem:[%s215 + $0x4] sm:$0xf] %v218
              $region37: #{module_repeater_forward.1} parent=31 // loop_footer
                %s213 = sadd.s32 1, %s209
              $region38: #{module_repeater_forward.1} parent=31 // loop_footer_branch
                %208 = sbr.rel target = $region34
              $region39: #{module_repeater_forward.1} parent=31 // loop_exit
                _
            $region32: #{module_repeater_forward.1} parent=23 // pred_fallthru
              _
          $region24: #{module_repeater_forward.1} parent=19 // pred_fallthru
            _
          %243 = vnop
        $region20: #{module_repeater_forward.1} parent=15 // pred_fallthru
          _
        // Predicated region
        $region58: #{module_repeater_forward.1} parent=15 // pred_check
          %p244 = pneg %p98
        $region59: #{module_repeater_forward.1} parent=15 // pred_check_branch
          %246 = sbr.rel (%p244) target = $region61
        $region60: #{module_repeater_forward.1} parent=15 // pred_region
          %s247 = sand.u32 %s88, 1
          %s248 = scalar_lea.sflag [#allocation7], %s247
          %s249 = sand.u32 %s88, 1
          %s250 = smul.addr %s249, 64
          %s251 = scalar_lea.vmem [#allocation6], %s250
          %s252 = sld [smem:[#allocation4]]
          %p253 = scmp.gt.s32.totalorder %s252, 0
          %s254 = scalar_select %p253, %s252, 0
          %p255 = scmp.lt.s32.totalorder %s254, 3
          %s256 = scalar_select %p255, %s254, 3
          %s257 = smul.u32 16, %s26
          %s259 = ssub.s32 1024, 1024
          %260 = vsyncadd %s248, %s259
          %s261 = smul.addr %s257, 3
          %s262 = sadd.s32 %s25, %s261
          %s263 = smul.addr %s256, 96
          %s264 = sadd.s32 %s262, %s263
          %s265 = smul.addr %s264, 64
          %s266 = scalar_lea.hbm %s2, %s265
          %s267 = sshll.u32 %s251, 4
          %s268 = int_to_ptr.vmem [resolvable:$true] %s267
          %273 = dma.hbm_to_vmem [thread:$0]  %s266, 1024, %s268, %s248, 192, 64, 4
        $region61: #{module_repeater_forward.1} parent=15 // pred_fallthru
          _
        // Predicated region
        $region62: #{module_repeater_forward.1} parent=15 // pred_check
          %p274 = pneg %p136
        $region63: #{module_repeater_forward.1} parent=15 // pred_check_branch
          %276 = sbr.rel (%p274) target = $region65
        $region64: #{module_repeater_forward.1} parent=15 // pred_region
          %s277 = sld [smem:[#allocation4]]
          %p278 = scmp.gt.s32.totalorder %s277, 0
          %s279 = scalar_select %p278, %s277, 0
          %p280 = scmp.lt.s32.totalorder %s279, 3
          %s281 = scalar_select %p280, %s279, 3
          %p282 = scmp.lt.s32.totalorder %s281, 3
          %s283 = scalar_select %p282, %s281, 3
          %p284 = scmp.lt.s32.totalorder %s25, 2
          %s285 = scalar_select %p284, %s25, 2
          %s286 = smul.addr %s283, 3
          %s287 = sadd.s32 %s285, %s286
          %s288 = scalar_lea.vmem %s3, %s287
          %s289 = sld [smem:[#allocation4]]
          %p290 = scmp.gt.s32.totalorder %s289, 0
          %s291 = scalar_select %p290, %s289, 0
          %p292 = scmp.lt.s32.totalorder %s291, 3
          %s293 = scalar_select %p292, %s291, 3
        $region65: #{module_repeater_forward.1} parent=15 // pred_fallthru
          _
      $region16: #{module_repeater_forward.1} parent=5 // pred_fallthru
        _
      %p294 = scmp.le.s32.totalorder 1, %s17
      %p295 = scmp.lt.s32.totalorder %s17, 7
      %p296 = pnand %p294, %p295
      %p297 = pneg %p296
      // Predicated region
      $region66: #{module_repeater_forward.1} parent=5 // pred_check
        _
      $region67: #{module_repeater_forward.1} parent=5 // pred_check_branch
        %299 = sbr.rel (%p296) target = $region69
      $region68: #{module_repeater_forward.1} parent=5 // pred_region
        %s300 = ssub.s32 %s17, 1
        %s301 = sand.u32 %s51, 1
        %s302 = sand.u32 %s51, 1
        %s303 = smul.addr %s302, 8
        %s304 = scalar_lea.vmem [#allocation5], %s303
        // Predicated region
        $region70: #{module_repeater_forward.1} parent=68 // pred_check
          %p305 = pneg %p64
        $region71: #{module_repeater_forward.1} parent=68 // pred_check_branch
          %307 = sbr.rel (%p305) target = $region73
        $region72: #{module_repeater_forward.1} parent=68 // pred_region
          _
        $region73: #{module_repeater_forward.1} parent=68 // pred_fallthru
          _
        %s308 = sand.u32 %s91, 1
        %s309 = scalar_lea.sflag [#allocation7], %s308
        %s310 = sand.u32 %s91, 1
        %s311 = smul.addr %s310, 64
        %s312 = scalar_lea.vmem [#allocation6], %s311
        // Predicated region
        $region74: #{module_repeater_forward.1} parent=68 // pred_check
          %p313 = pneg %p104
        $region75: #{module_repeater_forward.1} parent=68 // pred_check_branch
          %315 = sbr.rel (%p313) target = $region77
        $region76: #{module_repeater_forward.1} parent=68 // pred_region
          %316 = dma.done %s309, 1024
        $region77: #{module_repeater_forward.1} parent=68 // pred_fallthru
          _
        %s317 = sand.u32 %s51, 1
        %s318 = sand.u32 %s51, 1
        %s319 = smul.addr %s318, 8
        %s320 = scalar_lea.vmem [#allocation5], %s319
        %p321 = pneg %p64
        %p322 = pneg %p61
        %s323 = sand.u32 %s91, 1
        %s324 = scalar_lea.sflag [#allocation7], %s323
        %s325 = sand.u32 %s91, 1
        %s326 = smul.addr %s325, 64
        %s327 = scalar_lea.vmem [#allocation6], %s326
        %p328 = pneg %p104
        %p329 = pneg %p101
        %s330 = sld [smem:[#allocation4]]
        %p331 = scmp.gt.s32.totalorder %s330, 0
        %s332 = scalar_select %p331, %s330, 0
        %p333 = scmp.lt.s32.totalorder %s332, 3
        %s334 = scalar_select %p333, %s332, 3
        %p335 = scmp.lt.s32.totalorder %s334, 3
        %s336 = scalar_select %p335, %s334, 3
        %p337 = scmp.lt.s32.totalorder %s28, 2
        %s338 = scalar_select %p337, %s28, 2
        %s339 = smul.addr %s336, 3
        %s340 = sadd.s32 %s338, %s339
        %s341 = scalar_lea.vmem %s3, %s340
        %p342 = pneg %p142
        %p343 = pneg %p139
        %p344 = pneg %p170
        %p345 = pneg %p167
        %s346 = sand.u32 %s157, 1
        %s347 = scalar_lea.sflag [#allocation8], %s346
        %s348 = sand.u32 %s157, 1
        %s349 = smul.addr %s348, 16
        %s350 = scalar_lea.vmem [#allocation9], %s349
        %s351 = smul.u32 2, %s27
        %s352 = sld [smem:[#allocation4]]
        %p353 = scmp.gt.s32.totalorder %s352, 0
        %s354 = scalar_select %p353, %s352, 0
        %p355 = scmp.lt.s32.totalorder %s354, 3
        %s356 = scalar_select %p355, %s354, 3
        %s357 = smul.u32 16, %s29
        %s358 = sld [smem:[#allocation4]]
        %p359 = scmp.gt.s32.totalorder %s358, 0
        %s360 = scalar_select %p359, %s358, 0
        %p361 = scmp.lt.s32.totalorder %s360, 3
        %s362 = scalar_select %p361, %s360, 3
        %p363 = scmp.lt.s32.totalorder %s362, 3
        %s364 = scalar_select %p363, %s362, 3
        %p365 = scmp.lt.s32.totalorder %s28, 2
        %s366 = scalar_select %p365, %s28, 2
        %s367 = smul.addr %s364, 3
        %s368 = sadd.s32 %s366, %s367
        %s369 = scalar_lea.vmem %s3, %s368
        %s370 = sld [smem:[#allocation4]]
        %p371 = scmp.gt.s32.totalorder %s370, 0
        %s372 = scalar_select %p371, %s370, 0
        %p373 = scmp.lt.s32.totalorder %s372, 3
        %s374 = scalar_select %p373, %s372, 3
        %s375 = smul.u32 2, %s27
        %p377 = scmp.eq.s32.totalorder %s29, 0
        // Predicated region
        $region78: #{module_repeater_forward.1} parent=68 // pred_check
          %p378 = pneg %p377
        $region79: #{module_repeater_forward.1} parent=68 // pred_check_branch
          %380 = sbr.rel (%p378) target = $region81
        $region80: #{module_repeater_forward.1} parent=68 // pred_region
          %v381 = vld [vmem:[%s369] sm:$0x1]
          %v383 = vlaneseq
          %v384 = vshrl.u32 %v383, 7
          %v385 = vsub.s32 0, %v384
          %v386 = vrot.slane %v381, %v385
          %388 = vst [vmem:[#allocation2] sm:$0xff] %v386
          %389 = vst [vmem:[#allocation2 + $0x8] sm:$0xff] %v386
        $region81: #{module_repeater_forward.1} parent=68 // pred_fallthru
          _
        %v390 = vld [vmem:[#allocation2] sm:$0xff]
        %v391 = vld [vmem:[#allocation2 + $0x8] sm:$0xff]
        %v392 = vld [vmem:[%s304] sm:$0xf]
        %v393 = vld [vmem:[%s304 + $0x4] sm:$0xf]
        %v394 = vld [vmem:[%s312] sm:$0xf]
        %v395 = vld [vmem:[%s312 + $0x4] sm:$0xf]
        %v396 = vld [vmem:[%s312 + $0x8] sm:$0xf]
        %v397 = vld [vmem:[%s312 + $0xc] sm:$0xf]
        %v398 = vld [vmem:[%s312 + $0x10] sm:$0xf]
        %v399 = vld [vmem:[%s312 + $0x14] sm:$0xf]
        %v400 = vld [vmem:[%s312 + $0x18] sm:$0xf]
        %v401 = vld [vmem:[%s312 + $0x1c] sm:$0xf]
        %v402 = vld [vmem:[%s312 + $0x20] sm:$0xf]
        %v403 = vld [vmem:[%s312 + $0x24] sm:$0xf]
        %v404 = vld [vmem:[%s312 + $0x28] sm:$0xf]
        %v405 = vld [vmem:[%s312 + $0x2c] sm:$0xf]
        %v406 = vld [vmem:[%s312 + $0x30] sm:$0xf]
        %v407 = vld [vmem:[%s312 + $0x34] sm:$0xf]
        %v408 = vld [vmem:[%s312 + $0x38] sm:$0xf]
        %v409 = vld [vmem:[%s312 + $0x3c] sm:$0xf]
        %v412 = vunpack.c.l.b16 %v392
        %v413 = vunpack.c.l.b16 %v393
        %v414 = vpack.c.b16 %v413, %v412
        %v432 = vunpack.c.l.b16 %v394
        %v433 = vunpack.c.l.b16 %v395
        %v434 = vunpack.c.l.b16 %v396
        %v435 = vunpack.c.l.b16 %v397
        %v436 = vunpack.c.l.b16 %v398
        %v437 = vunpack.c.l.b16 %v399
        %v438 = vunpack.c.l.b16 %v400
        %v439 = vunpack.c.l.b16 %v401
        %v440 = vunpack.c.l.b16 %v402
        %v441 = vunpack.c.l.b16 %v403
        %v442 = vunpack.c.l.b16 %v404
        %v443 = vunpack.c.l.b16 %v405
        %v444 = vunpack.c.l.b16 %v406
        %v445 = vunpack.c.l.b16 %v407
        %v446 = vunpack.c.l.b16 %v408
        %v447 = vunpack.c.l.b16 %v409
        %v448 = vpack.c.b16 %v433, %v432
        %v449 = vpack.c.b16 %v435, %v434
        %v450 = vpack.c.b16 %v437, %v436
        %v451 = vpack.c.b16 %v439, %v438
        %v452 = vpack.c.b16 %v441, %v440
        %v453 = vpack.c.b16 %v443, %v442
        %v454 = vpack.c.b16 %v445, %v444
        %v455 = vpack.c.b16 %v447, %v446
        %464 = vmatprep.subr.bf16.mxu0 0
        %465 = vmatpush1.bf16.msra.mxu0 %v448
        %466 = vmatprep.subr.bf16.mxu0 0
        %467 = vmatpush1.bf16.msra.mxu0 %v449
        %468 = vmatprep.subr.bf16.mxu0 0
        %469 = vmatpush1.bf16.msra.mxu0 %v450
        %470 = vmatprep.subr.bf16.mxu0 0
        %471 = vmatpush1.bf16.msra.mxu0 %v451
        %472 = vmatprep.subr.bf16.mxu0 0
        %473 = vmatpush1.bf16.msra.mxu0 %v452
        %474 = vmatprep.subr.bf16.mxu0 0
        %475 = vmatpush1.bf16.msra.mxu0 %v453
        %476 = vmatprep.subr.bf16.mxu0 0
        %477 = vmatpush1.bf16.msra.mxu0 %v454
        %478 = vmatprep.subr.bf16.mxu0 0
        %479 = vmatpush1.bf16.msra.mxu0 %v455
        %480 = vmatprep.subr.bf16.mxu0 0
        %481 = vmatpush1.bf16.msra.mxu0 0
        %482 = vmatprep.subr.bf16.mxu0 0
        %483 = vmatpush1.bf16.msra.mxu0 0
        %484 = vmatprep.subr.bf16.mxu0 0
        %485 = vmatpush1.bf16.msra.mxu0 0
        %486 = vmatprep.subr.bf16.mxu0 0
        %487 = vmatpush1.bf16.msra.mxu0 0
        %488 = vmatprep.subr.bf16.mxu0 0
        %489 = vmatpush1.bf16.msra.mxu0 0
        %490 = vmatprep.subr.bf16.mxu0 0
        %491 = vmatpush1.bf16.msra.mxu0 0
        %492 = vmatprep.subr.bf16.mxu0 0
        %493 = vmatpush1.bf16.msra.mxu0 0
        %494 = vmatprep.subr.bf16.mxu0 0
        %495 = vmatpush1.bf16.msra.mxu0 0
        %496 = vmatprep.mubr.bf16.mxu0 0
        %497 = vmatmul.mubr.bf16.gmra.mrb[0].mxu0 %v414
        %v498 = vpop.f32.mrb[0].mxu0
        %v499 = vadd.f32 0.0, %v498
        %v500 = vpop.f32.mrb[0].mxu0
        %v501 = vpop.f32.mrb[0].mxu0
        %v502 = vadd.f32 0.0, %v501
        %v503 = vpop.f32.mrb[0].mxu0
        %504 = vdwg.mxu0
        %v505 = vadd.f32 %v390, %v499
        %v506 = vadd.f32 %v391, %v502
        %507 = vst [vmem:[#allocation2] sm:$0xff] %v505
        %508 = vst [vmem:[#allocation2 + $0x8] sm:$0xff] %v506
        %p509 = scmp.eq.s32.totalorder %s29, 1
        // Predicated region
        $region82: #{module_repeater_forward.1} parent=68 // pred_check
          %p510 = pneg %p509
        $region83: #{module_repeater_forward.1} parent=68 // pred_check_branch
          %512 = sbr.rel (%p510) target = $region85
        $region84: #{module_repeater_forward.1} parent=68 // pred_region
          %v513 = vld [vmem:[#allocation2] sm:$0xff]
          %v514 = vld [vmem:[#allocation2 + $0x8] sm:$0xff]
          %515 = vst [vmem:[%s350] sm:$0xff] %v513
          %516 = vst [vmem:[%s350 + $0x8] sm:$0xff] %v514
        $region85: #{module_repeater_forward.1} parent=68 // pred_fallthru
          _
        %s517 = sand.u32 %s157, 1
        %s518 = scalar_lea.sflag [#allocation8], %s517
        %s519 = sand.u32 %s157, 1
        %s520 = smul.addr %s519, 16
        %s521 = scalar_lea.vmem [#allocation9], %s520
        // Predicated region
        $region86: #{module_repeater_forward.1} parent=68 // pred_check
          %p522 = pneg %p167
        $region87: #{module_repeater_forward.1} parent=68 // pred_check_branch
          %524 = sbr.rel (%p522) target = $region89
        $region88: #{module_repeater_forward.1} parent=68 // pred_region
          %s525 = smul.u32 2, %s27
          %s527 = ssub.s32 256, 256
          %528 = vsyncadd %s518, %s527
          %s529 = smul.addr %s525, 3
          %s530 = sadd.s32 %s28, %s529
          %s531 = smul.addr %s530, 128
          %s532 = scalar_lea.hbm %s4, %s531
          %s533 = sshll.u32 %s521, 4
          %s534 = int_to_ptr.vmem [resolvable:$true] %s533
          %539 = dma.vmem_to_hbm [thread:$0]  %s534, 256, %s532, %s518, 128, 384, 8
        $region89: #{module_repeater_forward.1} parent=68 // pred_fallthru
          _
      $region69: #{module_repeater_forward.1} parent=5 // pred_fallthru
        _
      %p540 = scmp.le.s32.totalorder 2, %s17
      // Predicated region
      $region90: #{module_repeater_forward.1} parent=5 // pred_check
        %p541 = pneg %p540
      $region91: #{module_repeater_forward.1} parent=5 // pred_check_branch
        %543 = sbr.rel (%p541) target = $region93
      $region92: #{module_repeater_forward.1} parent=5 // pred_region
        %s544 = ssub.s32 %s17, 2
        // Predicated region
        $region94: #{module_repeater_forward.1} parent=92 // pred_check
          %p545 = pneg %p173
        $region95: #{module_repeater_forward.1} parent=92 // pred_check_branch
          %547 = sbr.rel (%p545) target = $region97
        $region96: #{module_repeater_forward.1} parent=92 // pred_region
          %s548 = sand.u32 %s158, 1
          %s549 = scalar_lea.sflag [#allocation8], %s548
          %s550 = sand.u32 %s158, 1
          %s551 = smul.addr %s550, 16
          %s552 = scalar_lea.vmem [#allocation9], %s551
          %553 = dma.done %s549, 256
        $region97: #{module_repeater_forward.1} parent=92 // pred_fallthru
          _
      $region93: #{module_repeater_forward.1} parent=5 // pred_fallthru
        _
    $region6: #{module_repeater_forward.1} parent=1 // loop_footer
      %s21 = sadd.s32 1, %s17
    $region7: #{module_repeater_forward.1} parent=1 // loop_footer_branch
      %16 = sbr.rel target = $region3
    $region8: #{module_repeater_forward.1} parent=1 // loop_exit
      _
    %554 = vsyncpa [#allocation7], 1
    %s555 = scalar_lea.sflag [#allocation7], 1
    %556 = vsyncpa %s555, 1
    %557 = vsyncpa [#allocation8], 1
    %s558 = scalar_lea.sflag [#allocation8], 1
    %559 = vsyncpa %s558, 1

</llo_original>
